<compile_context>
chip_gen: v7x
topology: tpu7x:2x2x1
jax: 0.10.0
libtpu: 0.0.40
codegen_flags: <defaults>
</compile_context>

<pallas_src>
import numpy as np
import jax
import jax.numpy as jnp
from jax.experimental import pallas as pl
from jax.experimental.pallas import tpu as pltpu


# ----------------------------------------------------------------------------
# Tree definition (deterministic, synthetic) -- mirrors the module's __init__
# arguments (tree, leaves, n_nodes).
# ----------------------------------------------------------------------------
TREE = {
    1: [2, 3],
    2: [4, 5],
    3: [6, 7],
    4: [8, 9],
    5: [10, 11],
    6: [12, 13],
    7: [14, 15],
}
LEAVES = [0, 8, 9, 10, 11, 12, 13, 14, 15]  # node 0 = "unclassified" leaf
N_NODES = 16

FOLD = 8      # batch rows folded into the lane axis
LANES = 128   # TPU lane width


def _preorder_traversal(nodes, root=1, order=None):
    if order is None:
        order = []
    order.append(root)
    if root in nodes:
        for child in nodes[root]:
            _preorder_traversal(nodes, root=child, order=order)
    return order


def build_path_matrix(tree, leaves, n_nodes):
    """PathMat[k, j] = 1.0 iff node k lies on the root->leaves[j] path."""
    parent = {}
    for node, children in tree.items():
        for c in children:
            parent[c] = node

    mat = np.zeros((n_nodes, len(leaves)), dtype=np.float32)
    for j, leaf in enumerate(leaves):
        if leaf == 0:
            mat[0, j] = 1.0
            continue
        node = leaf
        while True:
            mat[node, j] = 1.0
            if node == 1:  # reached the root
                break
            node = parent[node]
    return mat


def build_folded_path_matrix(path_mat, n_nodes, fold=FOLD):
    """Block-diagonal [fold*n_nodes, fold*n_nodes] path matrix.

    Each 16x16 diagonal block is the path matrix with its leaf dim zero-padded
    from n_leaves to n_nodes, so a folded taxa row [fold*n_nodes] maps to a
    folded output row [fold*n_nodes] holding `fold` independent leaf-sum
    vectors side by side.
    """
    n_leaves = path_mat.shape[1]
    block = np.zeros((n_nodes, n_nodes), dtype=np.float32)
    block[:, :n_leaves] = path_mat
    big = np.zeros((fold * n_nodes, fold * n_nodes), dtype=np.float32)
    for f in range(fold):
        big[f * n_nodes:(f + 1) * n_nodes, f * n_nodes:(f + 1) * n_nodes] = block
    return big


def _round_up(x, m):
    return (x + m - 1) // m * m


def _sublane(dtype):
    # Min sublane tile: 8 for 32-bit, 16 for bf16/f16, 32 for 8-bit types.
    return max(8, 32 // np.dtype(dtype).itemsize)


# ----------------------------------------------------------------------------
# Pallas kernel: one lane-dense MXU pass per folded-batch tile.
#   taxa_ref:  (TBF, 128)  -- TBF folded rows, each = 8 batch rows x 16 nodes
#   pmat_ref:  (128, 128)  -- block-diagonal path matrix (VMEM-resident)
#   out_ref:   (TBF, 128)  -- 8 batch rows x 16 (padded) leaf sums per row
# ----------------------------------------------------------------------------
def _rtl_kernel(taxa_ref, pmat_ref, out_ref):
    out_ref[...] = jnp.dot(
        taxa_ref[...], pmat_ref[...], preferred_element_type=jnp.float32
    ).astype(out_ref.dtype)


def root_to_leaf_sums(taxa_affinities, path_mat, *, block_rows=4096,
                      compute_dtype=None, min_grid_steps=4,
                      vmem_budget_bytes=10 << 20, return_folded=False):
    """rtl_sums[b, j] = sum over root->leaves[j] path of taxa_affinities[b, :].

    block_rows: target folded-batch rows per grid step (default 4096 folded
        rows = 2 MiB f32 per buffer; automatically capped by the VMEM budget,
        the batch size, and a >=min_grid_steps target so v7x's two TCs both
        get work).
    compute_dtype: optionally cast the streamed input (e.g. jnp.bfloat16) to
        halve HBM read traffic; accumulation stays f32.
    return_folded: return the [bf, 128] folded layout (no 16->9 slice copy);
        consumers that can fuse the slice should prefer this.
    """
    B, N = taxa_affinities.shape
    N2, L = path_mat.shape
    assert N == N2 == N_NODES
    out_dtype = taxa_affinities.dtype

    if compute_dtype is not None:
        taxa_affinities = taxa_affinities.astype(compute_dtype)
    in_dtype = taxa_affinities.dtype
    in_item = np.dtype(in_dtype).itemsize
    out_item = np.dtype(out_dtype).itemsize
    sub = max(_sublane(in_dtype), _sublane(out_dtype))

    # Folded, block-diagonal path matrix: [128, 128] (constant, VMEM-resident).
    pmat_folded = jnp.asarray(
        build_folded_path_matrix(np.asarray(path_mat, dtype=np.float32), N)
    ).astype(in_dtype)

    # Pad the batch ONLY if it is not already a multiple of the fold tile
    # (typical batches need no pad copy at all). Padding goes to the next
    # fold*sublane multiple so folded rows stay sublane-aligned.
    b_pad = _round_up(B, FOLD * sub)
    if b_pad != B:
        taxa_affinities = jnp.pad(taxa_affinities, ((0, b_pad - B), (0, 0)))
    bf = b_pad // FOLD                                    # folded rows (mult of sub)
    taxa_folded = taxa_affinities.reshape(bf, FOLD * N)   # [bf, 128], free reshape

    # --- tile size selection (HBM-bound: biggest tile that fits VMEM) -------
    # Cap so double-buffered input + output tiles fit under every generation's
    # scoped-VMEM default (v5e = 16 MiB is the tightest).
    cap_vmem = max(sub,
                   (vmem_budget_bytes // (2 * LANES * (in_item + out_item)))
                   // sub * sub)
    tbf = min(_round_up(max(block_rows, 1), sub), cap_vmem, bf)
    if min_grid_steps > 1:
        # Prefer >= min_grid_steps grid steps (v7x: both TCs stream, DMA of
        # step i+1 overlaps step i) but never shrink below a 256-row floor
        # (per-step overhead dominates below that).
        steps_rows = _round_up(pl.cdiv(bf, min_grid_steps), sub)
        floor_rows = min(256, tbf)
        tbf = min(tbf, max(steps_rows, floor_rows))
    tbf = max(tbf, sub)

    grid = (pl.cdiv(bf, tbf),)

    # Advisory cost: block-diagonal -> only N=16 live K terms per output lane;
    # output bytes use the true output dtype.
    cost = pl.CostEstimate(
        flops=2 * bf * LANES * N,
        transcendentals=0,
        bytes_accessed=(bf * LANES + LANES * LANES) * in_item
                       + bf * LANES * out_item,
    )

    out_folded = pl.pallas_call(
        _rtl_kernel,
        out_shape=jax.ShapeDtypeStruct((bf, LANES), out_dtype),
        grid_spec=pltpu.PrefetchScalarGridSpec(
            num_scalar_prefetch=0,
            grid=grid,
            in_specs=[
                pl.BlockSpec((tbf, LANES), lambda i: (i, 0)),    # batch-tiled
                pl.BlockSpec((LANES, LANES), lambda i: (0, 0)),  # VMEM-resident
            ],
            out_specs=pl.BlockSpec((tbf, LANES), lambda i: (i, 0)),
        ),
        compiler_params=pltpu.CompilerParams(
            dimension_semantics=("parallel",),   # shard batch tiles across TCs
        ),
        cost_estimate=cost,
    )(taxa_folded, pmat_folded)

    if return_folded:
        return out_folded

    # Unfold: [bf, 128] -> [b_pad, 16] (free reshape) -> [B, L] slice.
    # TODO(synk): the 16->L slice is an extra pass over the output on a
    # bandwidth-bound op; end-to-end callers should take return_folded=True
    # (or the [b_pad, 16] view) and let the slice fuse into the consumer.
    return out_folded.reshape(b_pad, N)[:B, :L]


# ----------------------------------------------------------------------------
# Pure-JAX reference replicating the PyTorch control flow exactly.
# ----------------------------------------------------------------------------
def root_to_leaf_sums_ref(taxa_affinities, tree, leaves):
    sums = {0: taxa_affinities[:, 0], 1: taxa_affinities[:, 1]}
    for node in _preorder_traversal(tree):
        if node in tree:
            for child in tree[node]:
                sums[child] = sums[node] + taxa_affinities[:, child]
    return jnp.stack([sums[i] for i in leaves], axis=1)


if __name__ == "__main__":
    k1, k2 = jax.random.split(jax.random.PRNGKey(0))
    path_mat = jnp.asarray(build_path_matrix(TREE, LEAVES, N_NODES))

    # Case 1: small batch with tiny explicit tiles -> multi-step, pipelined grid.
    B = 256
    taxa = jax.random.normal(k1, (B, N_NODES), dtype=jnp.float32)
    out = jax.block_until_ready(root_to_leaf_sums(taxa, path_mat, block_rows=8))
    ref = root_to_leaf_sums_ref(taxa, TREE, LEAVES)
    assert out.shape == (B, len(LEAVES)), out.shape
    assert np.allclose(np.asarray(out), np.asarray(ref), atol=1e-5, rtol=1e-5)

    # Case 2: default (large-tile) path with a batch that is NOT a multiple of
    # the fold -> exercises the minimal-pad + masked-store path.
    B2 = 131
    taxa2 = jax.random.normal(k2, (B2, N_NODES), dtype=jnp.float32)
    out2 = jax.block_until_ready(root_to_leaf_sums(taxa2, path_mat))
    ref2 = root_to_leaf_sums_ref(taxa2, TREE, LEAVES)
    assert out2.shape == (B2, len(LEAVES)), out2.shape
    assert np.allclose(np.asarray(out2), np.asarray(ref2), atol=1e-5, rtol=1e-5)

    # Case 3: opt-in bf16 streaming (f32 accumulation) -> half HBM read bytes;
    # tile rounding automatically switches to the bf16 (16,128) min tile.
    out3 = jax.block_until_ready(
        root_to_leaf_sums(taxa, path_mat, compute_dtype=jnp.bfloat16))
    assert out3.shape == (B, len(LEAVES)), out3.shape
    assert np.allclose(np.asarray(out3), np.asarray(ref), atol=0.15, rtol=0.05)

    print("KERNEL_OK")
</pallas_src>

<mosaic_0001>
module attributes {stable_mosaic.version = 11 : i64} {
  func.func @_rtl_kernel(%arg0: i32, %arg1: memref<8x128xf32, #tpu.memory_space<vmem>>, %arg2: memref<128x128xf32, #tpu.memory_space<vmem>>, %arg3: memref<8x128xf32, #tpu.memory_space<vmem>>) attributes {dimension_semantics = [#tpu.dimension_semantics<parallel>], iteration_bounds = array<i64: 4>, scalar_prefetch = 0 : i64, scratch_operands = 0 : i64, tpu.core_type = #tpu.core_type<tc>, window_params = [{transform_indices = @transform_0, window_bounds = array<i64: 8, 128>}, {pipeline_mode = #tpu.pipeline_mode<synchronous>, transform_indices = @transform_1, window_bounds = array<i64: 128, 128>}, {transform_indices = @transform_2, window_bounds = array<i64: 8, 128>}]} {
    %c0 = arith.constant 0 : index
    %c0_0 = arith.constant 0 : index
    %0 = vector.load %arg1[%c0, %c0_0] : memref<8x128xf32, #tpu.memory_space<vmem>>, vector<8x128xf32>
    %c0_1 = arith.constant 0 : index
    %c0_2 = arith.constant 0 : index
    %1 = vector.load %arg2[%c0_1, %c0_2] : memref<128x128xf32, #tpu.memory_space<vmem>>, vector<128x128xf32>
    %cst = arith.constant dense<0.000000e+00> : vector<8x128xf32>
    %2 = tpu.matmul %0, %1, %cst {dimension_numbers = #tpu.dot_dimension_numbers<[1], [0], [0], [1], [0, 0, 1, 1], [], []>} : vector<8x128xf32>, vector<128x128xf32>, vector<8x128xf32> -> vector<8x128xf32>
    %c0_3 = arith.constant 0 : index
    %c0_4 = arith.constant 0 : index
    %3 = vector.load %arg3[%c0_3, %c0_4] : memref<8x128xf32, #tpu.memory_space<vmem>>, vector<8x128xf32>
    tpu.vector_store %arg3[%c0_3, %c0_4], %2 {strides = array<i32>} : memref<8x128xf32, #tpu.memory_space<vmem>>, vector<8x128xf32>,
    return
  }
  func.func @transform_0(%arg0: i32) -> (i32, i32) {
    %c0_i32 = arith.constant 0 : i32
    %c0_i32_0 = arith.constant 0 : i32
    return %arg0, %c0_i32 : i32, i32
  }
  func.func @transform_1(%arg0: i32) -> (i32, i32) {
    %c0_i32 = arith.constant 0 : i32
    %c0_i32_0 = arith.constant 0 : i32
    %c0_i32_1 = arith.constant 0 : i32
    return %c0_i32, %c0_i32_0 : i32, i32
  }
  func.func @transform_2(%arg0: i32) -> (i32, i32) {
    %c0_i32 = arith.constant 0 : i32
    %c0_i32_0 = arith.constant 0 : i32
    return %arg0, %c0_i32 : i32, i32
  }
}

</mosaic_0001>

<llo_original>
// kernel: tpu_custom_call.1
$region0: #{tpu_custom_call.1}
  #allocation0 [shape = 'u32[]', space=smem, size = 0x4, offset = 0x4, fixed_abs, tag = 'smem constant byte address 0x4 - core index']
  #allocation1 [shape = 'u32[144,128]{1,0:T(1,128)}', space=vmem, size = 0x12000, scoped, tag = 'internal scratch']
  %s0 = inlined_call_operand.hbm [shape: f32[32,128], index: 0, kind: input, shape index: {}]
  %s1 = inlined_call_operand.hbm [shape: f32[128,128], index: 1, kind: input, shape index: {}]
  %s2 = inlined_call_operand.hbm [shape: f32[32,128], index: 2, kind: output, shape index: {}]
  %s3 = sld [smem:[#allocation0]]
  $region49: #{tpu_custom_call.1} parent=0
    _
  %s5 = ssub.s32 1, %s3
  %s6 = scalar_select 0, %s5, %s3
  $region1: #{tpu_custom_call.1} parent=0
    #allocation2 [shape = 'u8[8192]{0}', space=vmem, size = 0x2000, scoped, tag = 'input window, operand 0']
    #allocation3 [shape = 's32[2]{0}', space=sflag, size = 0x8, scoped, tag = 'scoped memory for tpu_custom_call.1']
    #allocation4 [shape = 's32[2]{0}', space=sflag, size = 0x8, scoped, tag = 'scoped memory for tpu_custom_call.1']
    #allocation5 [shape = 'u8[65536]{0}', space=vmem, size = 0x10000, scoped, tag = 'input window, operand 1, single buffered']
    #allocation6 [shape = 's32[1]{0}', space=sflag, size = 0x4, scoped, tag = 'scoped memory for tpu_custom_call.1']
    #allocation7 [shape = 'u8[8192]{0}', space=vmem, size = 0x2000, scoped, tag = 'output window, operand 0']
    %7 = vsyncpa [#allocation3], 0
    %s8 = scalar_lea.sflag [#allocation3], 1
    %9 = vsyncpa %s8, 0
    %10 = vsyncpa [#allocation6], 0
    %11 = vsyncpa [#allocation4], 0
    %s12 = scalar_lea.sflag [#allocation4], 1
    %13 = vsyncpa %s12, 0
    loop: start=0, step=1, limit=6
    $region2: #{tpu_custom_call.1} parent=1 // loop_pre_header
      _
    $region3: #{tpu_custom_call.1} parent=1 // loop_header
      %s15 = sphi 0, %s19
      %p16 = scmp.ge.s32.totalorder %s15, 6
      %s25 = sphi 0, %s27
      %s28 = sphi 0, %s25
      %s29 = sphi 0, %s28
      %s45 = sphi 0, %s29
      %s49 = sphi 0, %s49
      %s51 = sphi 0, %s49
      %s52 = sphi 0, %s51
      %s66 = sphi 0, %s52
      %s72 = sphi 0, %s74
      %s75 = sphi 0, %s72
      %s76 = sphi 0, %s75
      %s92 = sphi 0, %s76
    $region4: #{tpu_custom_call.1} parent=1 // loop_header_branch
      %18 = sbr.rel (%p16) target = $region8
    $region5: #{tpu_custom_call.1} parent=1 // loop_body
      %s20 = ssub.s32 %s15, 1
      %s21 = ssub.s32 %s15, 2
      %s22 = sadd.s32 %s15, 1
      %s23 = ssub.s32 %s15, %s22
      %p24 = scmp.eq.s32.totalorder %s23, 0
      %s26 = sadd.s32 %s25, 1
      %s27 = scalar_select %p24, %s25, %s26
      %p30 = pneg %p24
      %p31 = scmp.eq.s32.totalorder %s15, 3
      %p32 = por %p30, %p31
      %p33 = scmp.ne.s32.totalorder %s25, %s28
      %p34 = scmp.eq.s32.totalorder %s15, 0
      %p35 = por %p33, %p34
      %p36 = scmp.ne.s32.totalorder %s25, %s28
      %p37 = scmp.eq.s32.totalorder %s20, 3
      %p38 = por %p36, %p37
      %p39 = scmp.ne.s32.totalorder %s28, %s29
      %p40 = scmp.eq.s32.totalorder %s20, 0
      %p41 = por %p39, %p40
      %p42 = scmp.ne.s32.totalorder %s28, %s29
      %p43 = scmp.eq.s32.totalorder %s21, 3
      %p44 = por %p42, %p43
      %p46 = scmp.ne.s32.totalorder %s29, %s45
      %p47 = scmp.eq.s32.totalorder %s21, 0
      %p48 = por %p46, %p47
      %s50 = sadd.s32 %s49, 1
      %p53 = scmp.eq.s32.totalorder %s15, 3
      %p54 = scmp.ne.s32.totalorder %s49, %s51
      %p55 = scmp.eq.s32.totalorder %s15, 0
      %p56 = por %p54, %p55
      %p57 = scmp.ne.s32.totalorder %s49, %s51
      %p58 = scmp.eq.s32.totalorder %s20, 3
      %p59 = por %p57, %p58
      %p60 = scmp.ne.s32.totalorder %s51, %s52
      %p61 = scmp.eq.s32.totalorder %s20, 0
      %p62 = por %p60, %p61
      %p63 = scmp.ne.s32.totalorder %s51, %s52
      %p64 = scmp.eq.s32.totalorder %s21, 3
      %p65 = por %p63, %p64
      %p67 = scmp.ne.s32.totalorder %s52, %s66
      %p68 = scmp.eq.s32.totalorder %s21, 0
      %p69 = por %p67, %p68
      %s70 = ssub.s32 %s15, %s22
      %p71 = scmp.eq.s32.totalorder %s70, 0
      %s73 = sadd.s32 %s72, 1
      %s74 = scalar_select %p71, %s72, %s73
      %p77 = pneg %p71
      %p78 = scmp.eq.s32.totalorder %s15, 3
      %p79 = por %p77, %p78
      %p80 = scmp.ne.s32.totalorder %s72, %s75
      %p81 = scmp.eq.s32.totalorder %s15, 0
      %p82 = por %p80, %p81
      %p83 = scmp.ne.s32.totalorder %s72, %s75
      %p84 = scmp.eq.s32.totalorder %s20, 3
      %p85 = por %p83, %p84
      %p86 = scmp.ne.s32.totalorder %s75, %s76
      %p87 = scmp.eq.s32.totalorder %s20, 0
      %p88 = por %p86, %p87
      %p89 = scmp.ne.s32.totalorder %s75, %s76
      %p90 = scmp.eq.s32.totalorder %s21, 3
      %p91 = por %p89, %p90
      %p93 = scmp.ne.s32.totalorder %s76, %s92
      %p94 = scmp.eq.s32.totalorder %s21, 0
      %p95 = por %p93, %p94
      %p96 = scmp.le.s32.totalorder 1, %s15
      %p97 = scmp.lt.s32.totalorder %s15, 5
      %p98 = pnand %p96, %p97
      %p99 = pneg %p98
      // Predicated region
      $region9: #{tpu_custom_call.1} parent=5 // pred_check
        _
      $region10: #{tpu_custom_call.1} parent=5 // pred_check_branch
        %101 = sbr.rel (%p98) target = $region12
      $region11: #{tpu_custom_call.1} parent=5 // pred_region
        %s102 = ssub.s32 %s15, 1
        // Predicated region
        $region13: #{tpu_custom_call.1} parent=11 // pred_check
          %p103 = pneg %p62
        $region14: #{tpu_custom_call.1} parent=11 // pred_check_branch
          %105 = sbr.rel (%p103) target = $region16
        $region15: #{tpu_custom_call.1} parent=11 // pred_region
          %s107 = ssub.s32 2048, 2048
          %108 = vsyncadd [#allocation6], %s107
          %s109 = sshll.u32 [#allocation5], 4
          %s110 = int_to_ptr.vmem [resolvable:$true] %s109
          %115 = dma.hbm_to_vmem [thread:$0]  %s1, 2048, %s110, [#allocation6], 128, 128, 8
        $region16: #{tpu_custom_call.1} parent=11 // pred_fallthru
          _
      $region12: #{tpu_custom_call.1} parent=5 // pred_fallthru
        _
      %p116 = scmp.lt.s32.totalorder %s15, 4
      // Predicated region
      $region17: #{tpu_custom_call.1} parent=5 // pred_check
        %p117 = pneg %p116
      $region18: #{tpu_custom_call.1} parent=5 // pred_check_branch
        %119 = sbr.rel (%p117) target = $region20
      $region19: #{tpu_custom_call.1} parent=5 // pred_region
        // Predicated region
        $region21: #{tpu_custom_call.1} parent=19 // pred_check
          %p120 = pneg %p35
        $region22: #{tpu_custom_call.1} parent=19 // pred_check_branch
          %122 = sbr.rel (%p120) target = $region24
        $region23: #{tpu_custom_call.1} parent=19 // pred_region
          %s123 = sand.u32 %s25, 1
          %s124 = scalar_lea.sflag [#allocation3], %s123
          %s125 = sand.u32 %s25, 1
          %s126 = smul.addr %s125, 8
          %s127 = scalar_lea.vmem [#allocation2], %s126
          %s129 = ssub.s32 128, 128
          %130 = vsyncadd %s124, %s129
          %s131 = smul.addr %s15, 128
          %s132 = scalar_lea.hbm %s0, %s131
          %s134 = sshll.u32 %s127, 4
          %s135 = int_to_ptr.vmem [resolvable:$true] %s134
          %137 = dma.hbm_to_vmem [thread:$0]  %s132, 128, %s135, %s124
        $region24: #{tpu_custom_call.1} parent=19 // pred_fallthru
          _
      $region20: #{tpu_custom_call.1} parent=5 // pred_fallthru
        _
      %p138 = scmp.le.s32.totalorder 1, %s15
      %p139 = scmp.lt.s32.totalorder %s15, 5
      %p140 = pnand %p138, %p139
      %p141 = pneg %p140
      // Predicated region
      $region25: #{tpu_custom_call.1} parent=5 // pred_check
        _
      $region26: #{tpu_custom_call.1} parent=5 // pred_check_branch
        %143 = sbr.rel (%p140) target = $region28
      $region27: #{tpu_custom_call.1} parent=5 // pred_region
        %s144 = ssub.s32 %s15, 1
        %s145 = sand.u32 %s28, 1
        %s146 = scalar_lea.sflag [#allocation3], %s145
        %s147 = sand.u32 %s28, 1
        %s148 = smul.addr %s147, 8
        %s149 = scalar_lea.vmem [#allocation2], %s148
        // Predicated region
        $region29: #{tpu_custom_call.1} parent=27 // pred_check
          %p150 = pneg %p41
        $region30: #{tpu_custom_call.1} parent=27 // pred_check_branch
          %152 = sbr.rel (%p150) target = $region32
        $region31: #{tpu_custom_call.1} parent=27 // pred_region
          %153 = dma.done %s146, 128
        $region32: #{tpu_custom_call.1} parent=27 // pred_fallthru
          _
        // Predicated region
        $region33: #{tpu_custom_call.1} parent=27 // pred_check
          %p154 = pneg %p62
        $region34: #{tpu_custom_call.1} parent=27 // pred_check_branch
          %156 = sbr.rel (%p154) target = $region36
        $region35: #{tpu_custom_call.1} parent=27 // pred_region
          %157 = dma.done [#allocation6], 2048
        $region36: #{tpu_custom_call.1} parent=27 // pred_fallthru
          _
        %s158 = sand.u32 %s28, 1
        %s159 = scalar_lea.sflag [#allocation3], %s158
        %s160 = sand.u32 %s28, 1
        %s161 = smul.addr %s160, 8
        %s162 = scalar_lea.vmem [#allocation2], %s161
        %p163 = pneg %p41
        %p164 = pneg %p38
        %p165 = pneg %p62
        %p166 = pneg %p59
        %p167 = pneg %p88
        %p168 = pneg %p85
        %s169 = sand.u32 %s75, 1
        %s170 = scalar_lea.sflag [#allocation4], %s169
        %s171 = sand.u32 %s75, 1
        %s172 = smul.addr %s171, 8
        %s173 = scalar_lea.vmem [#allocation7], %s172
        %v174 = vld [vmem:[%s149] sm:$0xff]
        %v175 = vld [vmem:[#allocation5] sm:$0xff]
        %v176 = vld [vmem:[#allocation5 + $0x8] sm:$0xff]
        %v177 = vld [vmem:[#allocation5 + $0x10] sm:$0xff]
        %v178 = vld [vmem:[#allocation5 + $0x18] sm:$0xff]
        %v179 = vld [vmem:[#allocation5 + $0x20] sm:$0xff]
        %v180 = vld [vmem:[#allocation5 + $0x28] sm:$0xff]
        %v181 = vld [vmem:[#allocation5 + $0x30] sm:$0xff]
        %v182 = vld [vmem:[#allocation5 + $0x38] sm:$0xff]
        %v183 = vld [vmem:[#allocation5 + $0x40] sm:$0xff]
        %v184 = vld [vmem:[#allocation5 + $0x48] sm:$0xff]
        %v185 = vld [vmem:[#allocation5 + $0x50] sm:$0xff]
        %v186 = vld [vmem:[#allocation5 + $0x58] sm:$0xff]
        %v187 = vld [vmem:[#allocation5 + $0x60] sm:$0xff]
        %v188 = vld [vmem:[#allocation5 + $0x68] sm:$0xff]
        %v189 = vld [vmem:[#allocation5 + $0x70] sm:$0xff]
        %v190 = vld [vmem:[#allocation5 + $0x78] sm:$0xff]
        %191 = vmatprep.subr.mxu0 0.0
        %192 = vmatpush1.msra.mxu0 %v175
        %193 = vmatprep.subr.mxu0 0.0
        %194 = vmatpush1.msra.mxu0 %v176
        %195 = vmatprep.subr.mxu0 0.0
        %196 = vmatpush1.msra.mxu0 %v177
        %197 = vmatprep.subr.mxu0 0.0
        %198 = vmatpush1.msra.mxu0 %v178
        %199 = vmatprep.subr.mxu0 0.0
        %200 = vmatpush1.msra.mxu0 %v179
        %201 = vmatprep.subr.mxu0 0.0
        %202 = vmatpush1.msra.mxu0 %v180
        %203 = vmatprep.subr.mxu0 0.0
        %204 = vmatpush1.msra.mxu0 %v181
        %205 = vmatprep.subr.mxu0 0.0
        %206 = vmatpush1.msra.mxu0 %v182
        %207 = vmatprep.subr.mxu0 0.0
        %208 = vmatpush1.msra.mxu0 %v183
        %209 = vmatprep.subr.mxu0 0.0
        %210 = vmatpush1.msra.mxu0 %v184
        %211 = vmatprep.subr.mxu0 0.0
        %212 = vmatpush1.msra.mxu0 %v185
        %213 = vmatprep.subr.mxu0 0.0
        %214 = vmatpush1.msra.mxu0 %v186
        %215 = vmatprep.subr.mxu0 0.0
        %216 = vmatpush1.msra.mxu0 %v187
        %217 = vmatprep.subr.mxu0 0.0
        %218 = vmatpush1.msra.mxu0 %v188
        %219 = vmatprep.subr.mxu0 0.0
        %220 = vmatpush1.msra.mxu0 %v189
        %221 = vmatprep.subr.mxu0 0.0
        %222 = vmatpush1.msra.mxu0 %v190
        %223 = vmatprep.subr.mxu0 0.0
        %224 = vmatpush1.msra.mxu0 0.0
        %225 = vmatprep.subr.mxu0 0.0
        %226 = vmatpush1.msra.mxu0 0.0
        %227 = vmatprep.subr.mxu0 0.0
        %228 = vmatpush1.msra.mxu0 0.0
        %229 = vmatprep.subr.mxu0 0.0
        %230 = vmatpush1.msra.mxu0 0.0
        %231 = vmatprep.subr.mxu0 0.0
        %232 = vmatpush1.msra.mxu0 0.0
        %233 = vmatprep.subr.mxu0 0.0
        %234 = vmatpush1.msra.mxu0 0.0
        %235 = vmatprep.subr.mxu0 0.0
        %236 = vmatpush1.msra.mxu0 0.0
        %237 = vmatprep.subr.mxu0 0.0
        %238 = vmatpush1.msra.mxu0 0.0
        %239 = vmatprep.subr.mxu0 0.0
        %240 = vmatpush1.msra.mxu0 0.0
        %241 = vmatprep.subr.mxu0 0.0
        %242 = vmatpush1.msra.mxu0 0.0
        %243 = vmatprep.subr.mxu0 0.0
        %244 = vmatpush1.msra.mxu0 0.0
        %245 = vmatprep.subr.mxu0 0.0
        %246 = vmatpush1.msra.mxu0 0.0
        %247 = vmatprep.subr.mxu0 0.0
        %248 = vmatpush1.msra.mxu0 0.0
        %249 = vmatprep.subr.mxu0 0.0
        %250 = vmatpush1.msra.mxu0 0.0
        %251 = vmatprep.subr.mxu0 0.0
        %252 = vmatpush1.msra.mxu0 0.0
        %253 = vmatprep.subr.mxu0 0.0
        %254 = vmatpush1.msra.mxu0 0.0
        %255 = vmatprep.mubr.f32.mxu0 0.0
        %256 = vmatmul.mubr.f32.gmra.mrb[0].mxu0 %v174
        %v257 = vpop.f32.mrb[0].mxu0
        %v258 = vadd.f32 0.0, %v257
        %v259 = vpop.f32.mrb[0].mxu0
        %260 = vdwg.mxu0
        %261 = vst [vmem:[%s173] sm:$0xff] %v258
        %s262 = sand.u32 %s75, 1
        %s263 = scalar_lea.sflag [#allocation4], %s262
        %s264 = sand.u32 %s75, 1
        %s265 = smul.addr %s264, 8
        %s266 = scalar_lea.vmem [#allocation7], %s265
        // Predicated region
        $region37: #{tpu_custom_call.1} parent=27 // pred_check
          %p267 = pneg %p85
        $region38: #{tpu_custom_call.1} parent=27 // pred_check_branch
          %269 = sbr.rel (%p267) target = $region40
        $region39: #{tpu_custom_call.1} parent=27 // pred_region
          %s271 = ssub.s32 128, 128
          %272 = vsyncadd %s263, %s271
          %s273 = smul.addr %s20, 128
          %s274 = scalar_lea.hbm %s2, %s273
          %s276 = sshll.u32 %s266, 4
          %s277 = int_to_ptr.vmem [resolvable:$true] %s276
          %279 = dma.vmem_to_hbm [thread:$0]  %s277, 128, %s274, %s263
        $region40: #{tpu_custom_call.1} parent=27 // pred_fallthru
          _
      $region28: #{tpu_custom_call.1} parent=5 // pred_fallthru
        _
      %p280 = scmp.le.s32.totalorder 2, %s15
      // Predicated region
      $region41: #{tpu_custom_call.1} parent=5 // pred_check
        %p281 = pneg %p280
      $region42: #{tpu_custom_call.1} parent=5 // pred_check_branch
        %283 = sbr.rel (%p281) target = $region44
      $region43: #{tpu_custom_call.1} parent=5 // pred_region
        %s284 = ssub.s32 %s15, 2
        // Predicated region
        $region45: #{tpu_custom_call.1} parent=43 // pred_check
          %p285 = pneg %p91
        $region46: #{tpu_custom_call.1} parent=43 // pred_check_branch
          %287 = sbr.rel (%p285) target = $region48
        $region47: #{tpu_custom_call.1} parent=43 // pred_region
          %s288 = sand.u32 %s76, 1
          %s289 = scalar_lea.sflag [#allocation4], %s288
          %s290 = sand.u32 %s76, 1
          %s291 = smul.addr %s290, 8
          %s292 = scalar_lea.vmem [#allocation7], %s291
          %293 = dma.done %s289, 128
        $region48: #{tpu_custom_call.1} parent=43 // pred_fallthru
          _
      $region44: #{tpu_custom_call.1} parent=5 // pred_fallthru
        _
    $region6: #{tpu_custom_call.1} parent=1 // loop_footer
      %s19 = sadd.s32 1, %s15
    $region7: #{tpu_custom_call.1} parent=1 // loop_footer_branch
      %14 = sbr.rel target = $region3
    $region8: #{tpu_custom_call.1} parent=1 // loop_exit
      _
    %294 = vsyncpa [#allocation3], 1
    %s295 = scalar_lea.sflag [#allocation3], 1
    %296 = vsyncpa %s295, 1
    %297 = vsyncpa [#allocation6], 1
    %298 = vsyncpa [#allocation4], 1
    %s299 = scalar_lea.sflag [#allocation4], 1
    %300 = vsyncpa %s299, 1

</llo_original>
